<compile_context>
chip_gen: v7x
topology: tpu7x:2x2x1
jax: 0.10.0
libtpu: 0.0.40
codegen_flags: <defaults>
</compile_context>

<pallas_src>
import functools

import jax
import jax.numpy as jnp
from jax.experimental import pallas as pl
from jax.experimental.pallas import tpu as pltpu

NEG_SLOPE = 0.01  # torch.nn.LeakyReLU default


def _leaky(x):
    return jnp.where(x > 0, x, NEG_SLOPE * x)


def _causal_block_kernel(x_ref, w1_ref, b1_ref, w2_ref, b2_ref, *rest,
                         tl, pad, dilation, K, has_proj, final):
    # x_ref:  (1, C_in, TL)  current L-tile of one batch element (bf16)
    # w1_ref: (K, C_out, C_in)   w2_ref: (K, C_out, C_out)   (bf16)
    # b1/b2:  (C_out, 1) f32
    # proj:   wr_ref (C_out, C_in) bf16, br_ref (C_out, 1) f32
    # o_ref:  (1, C_out, TL)
    # xext_ref: VMEM (C_in,  TL+pad)  -- cols [0,pad) = carried x halo
    # hext_ref: VMEM (C_out, TL+pad)  -- cols [0,pad) = carried h1 halo (f32)
    if has_proj:
        wr_ref, br_ref, o_ref, xext_ref, hext_ref = rest
    else:
        o_ref, xext_ref, hext_ref = rest

    li = pl.program_id(1)
    c_out = o_ref.shape[1]

    # First L-tile of this batch element: the causal left-padding is zeros.
    if pad > 0:
        @pl.when(li == 0)
        def _():
            xext_ref[:, 0:pad] = jnp.zeros((xext_ref.shape[0], pad), xext_ref.dtype)
            hext_ref[:, 0:pad] = jnp.zeros((hext_ref.shape[0], pad), hext_ref.dtype)

    # Place the current tile after the carried halo:  xext col j == x[l0-pad+j]
    xext_ref[:, pad:pad + tl] = x_ref[0]
    xe = xext_ref[...]                              # (C_in, TL+pad) bf16

    # ---- conv1 (dilated, causal), taps unrolled, f32 accumulation ----
    acc1 = jnp.zeros((c_out, tl), jnp.float32)
    for k in range(K):
        acc1 = acc1 + jnp.dot(w1_ref[k], xe[:, k * dilation:k * dilation + tl],
                              preferred_element_type=jnp.float32)
    h1 = _leaky(acc1 + b1_ref[...])                 # (C_out, TL) f32

    # ---- conv2 (dilated, causal) over [carried h1 halo | h1] ----
    hext_ref[:, pad:pad + tl] = h1
    he = hext_ref[...]                              # (C_out, TL+pad) f32
    acc2 = jnp.zeros((c_out, tl), jnp.float32)
    for k in range(K):
        acc2 = acc2 + jnp.dot(w2_ref[k], he[:, k * dilation:k * dilation + tl],
                              preferred_element_type=jnp.float32)
    h2 = _leaky(acc2 + b2_ref[...])                 # (C_out, TL) f32

    # ---- residual ----
    x_cur = xe[:, pad:pad + tl]
    if has_proj:
        res = jnp.dot(wr_ref[...], x_cur, preferred_element_type=jnp.float32) + br_ref[...]
    else:
        res = x_cur.astype(jnp.float32)             # identity (C_in == C_out)

    out = h2 + res
    if final:
        out = _leaky(out)
    o_ref[0] = out.astype(o_ref.dtype)

    # Carry the last `pad` columns forward for the next L-tile of this batch
    # element (reset/overwritten at the next element's li == 0 step).
    if pad > 0:
        xext_ref[:, 0:pad] = xe[:, tl:tl + pad]
        hext_ref[:, 0:pad] = he[:, tl:tl + pad]


def _choose_tile_l(L, pad, c_in, c_out, in_itemsize, max_tile_l):
    """Pick an L tile: multiple of 128 (lane-dense), bounded so the working set
    fits comfortably inside the scoped-VMEM default on v5e/v6e/v7x."""
    if L <= max_tile_l:
        return L                       # single tile; block == full L dim
    budget = 12 * 1024 * 1024          # conservative for all generations (v7x: 64 MiB physical)
    tl = 128
    while True:
        nxt = tl * 2
        if nxt > max_tile_l or nxt > L:
            break
        est = (2 * nxt * c_in * in_itemsize        # double-buffered input block
               + 2 * nxt * c_out * 4               # double-buffered output block
               + (nxt + pad) * (c_in * in_itemsize + c_out * 4)  # carry scratch
               + 6 * nxt * c_out * 4)              # live f32 temporaries
        if est > budget:
            break
        tl = nxt
    return tl


def causal_convolution_block(x, w1, b1, w2, b2, wr=None, br=None, *,
                             dilation, final=False, max_tile_l=512):
    """x: (B, C_in, L) (NCL, bf16 or f32).  Weights already weight-normalized.
       w1: (K, C_out, C_in), w2: (K, C_out, C_out), wr: (C_out, C_in) or None
       (identity residual, requires C_in == C_out).  Returns (B, C_out, L)."""
    B, C_in, L = x.shape
    K, C_out, _ = w1.shape
    pad = (K - 1) * dilation
    has_proj = wr is not None
    if not has_proj:
        assert C_in == C_out, "identity residual requires in_channels == out_channels"

    TL = _choose_tile_l(L, pad, C_in, C_out, jnp.dtype(x.dtype).itemsize, max_tile_l)
    n_l = pl.cdiv(L, TL)

    b1_2d = b1.reshape(C_out, 1).astype(jnp.float32)
    b2_2d = b2.reshape(C_out, 1).astype(jnp.float32)

    kernel = functools.partial(_causal_block_kernel, tl=TL, pad=pad,
                               dilation=dilation, K=K, has_proj=has_proj, final=final)

    in_specs = [
        pl.BlockSpec((1, C_in, TL), lambda b, l: (b, 0, l)),
        pl.BlockSpec((K, C_out, C_in), lambda b, l: (0, 0, 0)),
        pl.BlockSpec((C_out, 1), lambda b, l: (0, 0)),
        pl.BlockSpec((K, C_out, C_out), lambda b, l: (0, 0, 0)),
        pl.BlockSpec((C_out, 1), lambda b, l: (0, 0)),
    ]
    inputs = [x, w1, b1_2d, w2, b2_2d]
    if has_proj:
        br_2d = br.reshape(C_out, 1).astype(jnp.float32)
        in_specs += [pl.BlockSpec((C_out, C_in), lambda b, l: (0, 0)),
                     pl.BlockSpec((C_out, 1), lambda b, l: (0, 0))]
        inputs += [wr, br_2d]

    return pl.pallas_call(
        kernel,
        out_shape=jax.ShapeDtypeStruct((B, C_out, L), x.dtype),
        grid_spec=pltpu.PrefetchScalarGridSpec(
            num_scalar_prefetch=0,
            grid=(B, n_l),
            in_specs=in_specs,
            out_specs=pl.BlockSpec((1, C_out, TL), lambda b, l: (b, 0, l)),
            scratch_shapes=[pltpu.VMEM((C_in, TL + pad), x.dtype),
                            pltpu.VMEM((C_out, TL + pad), jnp.float32)],
        ),
        # B is parallel (v7x megacore); L must be sequential for the carried halo.
        compiler_params=pltpu.CompilerParams(
            dimension_semantics=("parallel", "arbitrary")),
    )(*inputs)


# --------------------------- parameter setup (glue) ---------------------------

def weight_norm(v, g):
    """PyTorch weight_norm with dim=0 on a Conv1d weight v: (C_out, C_in, K)."""
    norm = jnp.sqrt(jnp.sum(v * v, axis=(1, 2), keepdims=True))
    return g.reshape(-1, 1, 1) * v / norm


def make_params(key, in_channels, out_channels, kernel_size):
    ks = jax.random.split(key, 8)
    v1 = jax.random.normal(ks[0], (out_channels, in_channels, kernel_size)) * 0.3
    g1 = jax.random.uniform(ks[1], (out_channels,), minval=0.5, maxval=1.5)
    b1 = jax.random.normal(ks[2], (out_channels,)) * 0.1
    v2 = jax.random.normal(ks[3], (out_channels, out_channels, kernel_size)) * 0.3
    g2 = jax.random.uniform(ks[4], (out_channels,), minval=0.5, maxval=1.5)
    b2 = jax.random.normal(ks[5], (out_channels,)) * 0.1
    wr = jax.random.normal(ks[6], (out_channels, in_channels)) * 0.3   # 1x1 conv
    br = jax.random.normal(ks[7], (out_channels,)) * 0.1
    w1 = jnp.transpose(weight_norm(v1, g1), (2, 0, 1))  # (K, C_out, C_in)
    w2 = jnp.transpose(weight_norm(v2, g2), (2, 0, 1))  # (K, C_out, C_out)
    return w1, b1, w2, b2, wr, br


# ------------------------------ pure-JAX reference ----------------------------

def reference(x, w1, b1, w2, b2, wr, br, *, dilation, final=False):
    x32 = x.astype(jnp.float32)

    def causal_conv(h, w, b):                      # h: (B, C, L), w: (K, Co, C)
        Kk = w.shape[0]
        pad = (Kk - 1) * dilation
        L = h.shape[2]
        hp = jnp.pad(h, ((0, 0), (0, 0), (pad, 0)))
        out = jnp.zeros((h.shape[0], w.shape[1], L), jnp.float32)
        for k in range(Kk):
            out = out + jnp.einsum("oc,bcl->bol", w[k].astype(jnp.float32),
                                   hp[:, :, k * dilation:k * dilation + L])
        return out + b.astype(jnp.float32).reshape(1, -1, 1)

    h1 = _leaky(causal_conv(x32, w1, b1))
    h2 = _leaky(causal_conv(h1, w2, b2))
    if wr is None:
        res = x32
    else:
        res = jnp.einsum("oc,bcl->bol", wr.astype(jnp.float32), x32) \
              + br.astype(jnp.float32).reshape(1, -1, 1)
    out = h2 + res
    return _leaky(out) if final else out


if __name__ == "__main__":
    key = jax.random.PRNGKey(0)
    k1, k2, k3, k4 = jax.random.split(key, 4)

    # ---- Case 1: projection residual (C_in != C_out), single L tile ----
    B, C_in, C_out, L = 2, 4, 8, 16
    kernel_size, dilation, final = 3, 2, False
    x = jax.random.normal(k1, (B, C_in, L), dtype=jnp.float32)
    w1, b1, w2, b2, wr, br = make_params(k2, C_in, C_out, kernel_size)
    # bf16 storage (f32 accumulation inside the kernel)
    xb = x.astype(jnp.bfloat16)
    w1b, w2b, wrb = w1.astype(jnp.bfloat16), w2.astype(jnp.bfloat16), wr.astype(jnp.bfloat16)

    out = causal_convolution_block(xb, w1b, b1, w2b, b2, wrb, br,
                                   dilation=dilation, final=final)
    out = jax.block_until_ready(out)
    ref = reference(xb, w1b, b1, w2b, b2, wrb, br, dilation=dilation, final=final)
    assert out.shape == (B, C_out, L)
    # tolerance accounts for the bf16 output rounding (~0.4% rel)
    assert jnp.allclose(out.astype(jnp.float32), ref, atol=1e-2, rtol=1e-2), \
        "case 1 mismatch vs reference"

    # ---- Case 2: identity residual (C_in == C_out), multi-tile L (carried halo) ----
    B2, C2, L2, K2, d2 = 2, 8, 256, 3, 4
    x2 = jax.random.normal(k3, (B2, C2, L2), dtype=jnp.float32)
    w1_2, b1_2, w2_2, b2_2, _, _ = make_params(k4, C2, C2, K2)
    x2b = x2.astype(jnp.bfloat16)
    w1_2b, w2_2b = w1_2.astype(jnp.bfloat16), w2_2.astype(jnp.bfloat16)

    out2 = causal_convolution_block(x2b, w1_2b, b1_2, w2_2b, b2_2, None, None,
                                    dilation=d2, final=True, max_tile_l=128)
    out2 = jax.block_until_ready(out2)
    ref2 = reference(x2b, w1_2b, b1_2, w2_2b, b2_2, None, None, dilation=d2, final=True)
    assert out2.shape == (B2, C2, L2)
    assert jnp.allclose(out2.astype(jnp.float32), ref2, atol=1e-2, rtol=1e-2), \
        "case 2 mismatch vs reference"

    print("KERNEL_OK")
</pallas_src>

<mosaic_0001>
module attributes {stable_mosaic.version = 11 : i64} {
  func.func @_causal_block_kernel(%arg0: i32, %arg1: i32, %arg2: memref<1x4x16xbf16, #tpu.memory_space<vmem>>, %arg3: memref<3x8x4xbf16, #tpu.memory_space<vmem>>, %arg4: memref<8x1xf32, #tpu.memory_space<vmem>>, %arg5: memref<3x8x8xbf16, #tpu.memory_space<vmem>>, %arg6: memref<8x1xf32, #tpu.memory_space<vmem>>, %arg7: memref<8x4xbf16, #tpu.memory_space<vmem>>, %arg8: memref<8x1xf32, #tpu.memory_space<vmem>>, %arg9: memref<1x8x16xbf16, #tpu.memory_space<vmem>>, %arg10: memref<4x20xbf16, #tpu.memory_space<vmem>>, %arg11: memref<8x20xf32, #tpu.memory_space<vmem>>) attributes {dimension_semantics = [#tpu.dimension_semantics<parallel>, #tpu.dimension_semantics<arbitrary>], iteration_bounds = array<i64: 2, 1>, scalar_prefetch = 0 : i64, scratch_operands = 2 : i64, tpu.core_type = #tpu.core_type<tc>, window_params = [{transform_indices = @transform_0, window_bounds = array<i64: 1, 4, 16>}, {pipeline_mode = #tpu.pipeline_mode<synchronous>, transform_indices = @transform_1, window_bounds = array<i64: 3, 8, 4>}, {pipeline_mode = #tpu.pipeline_mode<synchronous>, transform_indices = @transform_2, window_bounds = array<i64: 8, 1>}, {pipeline_mode = #tpu.pipeline_mode<synchronous>, transform_indices = @transform_3, window_bounds = array<i64: 3, 8, 8>}, {pipeline_mode = #tpu.pipeline_mode<synchronous>, transform_indices = @transform_4, window_bounds = array<i64: 8, 1>}, {pipeline_mode = #tpu.pipeline_mode<synchronous>, transform_indices = @transform_5, window_bounds = array<i64: 8, 4>}, {pipeline_mode = #tpu.pipeline_mode<synchronous>, transform_indices = @transform_6, window_bounds = array<i64: 8, 1>}, {transform_indices = @transform_7, window_bounds = array<i64: 1, 8, 16>}]} {
    %c0_i32 = arith.constant 0 : i32
    %0 = arith.cmpi eq, %arg1, %c0_i32 : i32
    %1 = arith.extui %0 : i1 to i32
    %c0_i32_0 = arith.constant 0 : i32
    %2 = arith.cmpi ne, %1, %c0_i32_0 : i32
    scf.if %2 {
      %cst_53 = arith.constant 0.000000e+00 : bf16
      %72 = vector.broadcast %cst_53 : bf16 to vector<4x4xbf16>
      %c0_54 = arith.constant 0 : index
      %c0_55 = arith.constant 0 : index
      %73 = vector.load %arg10[%c0_54, %c0_55] : memref<4x20xbf16, #tpu.memory_space<vmem>>, vector<4x4xbf16>
      tpu.vector_store %arg10[%c0_54, %c0_55], %72 {strides = array<i32>} : memref<4x20xbf16, #tpu.memory_space<vmem>>, vector<4x4xbf16>,
      %cst_56 = arith.constant 0.000000e+00 : f32
      %74 = vector.broadcast %cst_56 : f32 to vector<8x4xf32>
      %c0_57 = arith.constant 0 : index
      %c0_58 = arith.constant 0 : index
      %75 = vector.load %arg11[%c0_57, %c0_58] : memref<8x20xf32, #tpu.memory_space<vmem>>, vector<8x4xf32>
      tpu.vector_store %arg11[%c0_57, %c0_58], %74 {strides = array<i32>} : memref<8x20xf32, #tpu.memory_space<vmem>>, vector<8x4xf32>,
    } else {
    }
    %c0 = arith.constant 0 : index
    %c0_1 = arith.constant 0 : index
    %c0_2 = arith.constant 0 : index
    %3 = vector.load %arg2[%c0, %c0_1, %c0_2] : memref<1x4x16xbf16, #tpu.memory_space<vmem>>, vector<1x4x16xbf16>
    %4 = vector.shape_cast %3 : vector<1x4x16xbf16> to vector<4x16xbf16>
    %c0_3 = arith.constant 0 : index
    %c4 = arith.constant 4 : index
    %5 = vector.load %arg10[%c0_3, %c4] : memref<4x20xbf16, #tpu.memory_space<vmem>>, vector<4x16xbf16>
    tpu.vector_store %arg10[%c0_3, %c4], %4 {strides = array<i32>} : memref<4x20xbf16, #tpu.memory_space<vmem>>, vector<4x16xbf16>,
    %c0_4 = arith.constant 0 : index
    %c0_5 = arith.constant 0 : index
    %6 = vector.load %arg10[%c0_4, %c0_5] : memref<4x20xbf16, #tpu.memory_space<vmem>>, vector<4x20xbf16>
    %cst = arith.constant 0.000000e+00 : f32
    %7 = vector.broadcast %cst : f32 to vector<8x16xf32>
    %c0_6 = arith.constant 0 : index
    %c0_7 = arith.constant 0 : index
    %c0_8 = arith.constant 0 : index
    %8 = vector.load %arg3[%c0_6, %c0_7, %c0_8] : memref<3x8x4xbf16, #tpu.memory_space<vmem>>, vector<1x8x4xbf16>
    %9 = vector.shape_cast %8 : vector<1x8x4xbf16> to vector<8x4xbf16>
    %10 = vector.extract_strided_slice %6 {offsets = [0, 0], sizes = [4, 16], strides = [1, 1]} : vector<4x20xbf16> to vector<4x16xbf16>
    %cst_9 = arith.constant dense<0.000000e+00> : vector<8x16xf32>
    %11 = tpu.matmul %9, %10, %cst_9 {dimension_numbers = #tpu.dot_dimension_numbers<[1], [0], [0], [1], [0, 0, 1, 1], [], []>} : vector<8x4xbf16>, vector<4x16xbf16>, vector<8x16xf32> -> vector<8x16xf32>
    %12 = arith.addf %7, %11 : vector<8x16xf32>
    %c1 = arith.constant 1 : index
    %c0_10 = arith.constant 0 : index
    %c0_11 = arith.constant 0 : index
    %13 = vector.load %arg3[%c1, %c0_10, %c0_11] : memref<3x8x4xbf16, #tpu.memory_space<vmem>>, vector<1x8x4xbf16>
    %14 = vector.shape_cast %13 : vector<1x8x4xbf16> to vector<8x4xbf16>
    %15 = vector.extract_strided_slice %6 {offsets = [0, 2], sizes = [4, 16], strides = [1, 1]} : vector<4x20xbf16> to vector<4x16xbf16>
    %cst_12 = arith.constant dense<0.000000e+00> : vector<8x16xf32>
    %16 = tpu.matmul %14, %15, %cst_12 {dimension_numbers = #tpu.dot_dimension_numbers<[1], [0], [0], [1], [0, 0, 1, 1], [], []>} : vector<8x4xbf16>, vector<4x16xbf16>, vector<8x16xf32> -> vector<8x16xf32>
    %17 = arith.addf %12, %16 : vector<8x16xf32>
    %c2 = arith.constant 2 : index
    %c0_13 = arith.constant 0 : index
    %c0_14 = arith.constant 0 : index
    %18 = vector.load %arg3[%c2, %c0_13, %c0_14] : memref<3x8x4xbf16, #tpu.memory_space<vmem>>, vector<1x8x4xbf16>
    %19 = vector.shape_cast %18 : vector<1x8x4xbf16> to vector<8x4xbf16>
    %20 = vector.extract_strided_slice %6 {offsets = [0, 4], sizes = [4, 16], strides = [1, 1]} : vector<4x20xbf16> to vector<4x16xbf16>
    %cst_15 = arith.constant dense<0.000000e+00> : vector<8x16xf32>
    %21 = tpu.matmul %19, %20, %cst_15 {dimension_numbers = #tpu.dot_dimension_numbers<[1], [0], [0], [1], [0, 0, 1, 1], [], []>} : vector<8x4xbf16>, vector<4x16xbf16>, vector<8x16xf32> -> vector<8x16xf32>
    %22 = arith.addf %17, %21 : vector<8x16xf32>
    %c0_16 = arith.constant 0 : index
    %c0_17 = arith.constant 0 : index
    %23 = vector.load %arg4[%c0_16, %c0_17] : memref<8x1xf32, #tpu.memory_space<vmem>>, vector<8x1xf32>
    %24 = vector.broadcast %23 : vector<8x1xf32> to vector<8x16xf32>
    %25 = arith.addf %22, %24 : vector<8x16xf32>
    %cst_18 = arith.constant 0.000000e+00 : f32
    %26 = vector.broadcast %cst_18 : f32 to vector<8x16xf32>
    %27 = arith.cmpf ogt, %25, %26 : vector<8x16xf32>
    %cst_19 = arith.constant 0.00999999977 : f32
    %28 = vector.broadcast %cst_19 : f32 to vector<8x16xf32>
    %29 = arith.mulf %28, %25 : vector<8x16xf32>
    %30 = arith.select %27, %25, %29 : vector<8x16xi1>, vector<8x16xf32>
    %c0_20 = arith.constant 0 : index
    %c4_21 = arith.constant 4 : index
    %31 = vector.load %arg11[%c0_20, %c4_21] : memref<8x20xf32, #tpu.memory_space<vmem>>, vector<8x16xf32>
    tpu.vector_store %arg11[%c0_20, %c4_21], %30 {strides = array<i32>} : memref<8x20xf32, #tpu.memory_space<vmem>>, vector<8x16xf32>,
    %c0_22 = arith.constant 0 : index
    %c0_23 = arith.constant 0 : index
    %32 = vector.load %arg11[%c0_22, %c0_23] : memref<8x20xf32, #tpu.memory_space<vmem>>, vector<8x20xf32>
    %cst_24 = arith.constant 0.000000e+00 : f32
    %33 = vector.broadcast %cst_24 : f32 to vector<8x16xf32>
    %c0_25 = arith.constant 0 : index
    %c0_26 = arith.constant 0 : index
    %c0_27 = arith.constant 0 : index
    %34 = vector.load %arg5[%c0_25, %c0_26, %c0_27] : memref<3x8x8xbf16, #tpu.memory_space<vmem>>, vector<1x8x8xbf16>
    %35 = vector.shape_cast %34 : vector<1x8x8xbf16> to vector<8x8xbf16>
    %36 = vector.extract_strided_slice %32 {offsets = [0, 0], sizes = [8, 16], strides = [1, 1]} : vector<8x20xf32> to vector<8x16xf32>
    %cst_28 = arith.constant dense<0.000000e+00> : vector<8x16xf32>
    %37 = tpu.matmul %35, %36, %cst_28 {dimension_numbers = #tpu.dot_dimension_numbers<[1], [0], [0], [1], [0, 0, 1, 1], [], []>} : vector<8x8xbf16>, vector<8x16xf32>, vector<8x16xf32> -> vector<8x16xf32>
    %38 = arith.addf %33, %37 : vector<8x16xf32>
    %c1_29 = arith.constant 1 : index
    %c0_30 = arith.constant 0 : index
    %c0_31 = arith.constant 0 : index
    %39 = vector.load %arg5[%c1_29, %c0_30, %c0_31] : memref<3x8x8xbf16, #tpu.memory_space<vmem>>, vector<1x8x8xbf16>
    %40 = vector.shape_cast %39 : vector<1x8x8xbf16> to vector<8x8xbf16>
    %41 = vector.extract_strided_slice %32 {offsets = [0, 2], sizes = [8, 16], strides = [1, 1]} : vector<8x20xf32> to vector<8x16xf32>
    %cst_32 = arith.constant dense<0.000000e+00> : vector<8x16xf32>
    %42 = tpu.matmul %40, %41, %cst_32 {dimension_numbers = #tpu.dot_dimension_numbers<[1], [0], [0], [1], [0, 0, 1, 1], [], []>} : vector<8x8xbf16>, vector<8x16xf32>, vector<8x16xf32> -> vector<8x16xf32>
    %43 = arith.addf %38, %42 : vector<8x16xf32>
    %c2_33 = arith.constant 2 : index
    %c0_34 = arith.constant 0 : index
    %c0_35 = arith.constant 0 : index
    %44 = vector.load %arg5[%c2_33, %c0_34, %c0_35] : memref<3x8x8xbf16, #tpu.memory_space<vmem>>, vector<1x8x8xbf16>
    %45 = vector.shape_cast %44 : vector<1x8x8xbf16> to vector<8x8xbf16>
    %46 = vector.extract_strided_slice %32 {offsets = [0, 4], sizes = [8, 16], strides = [1, 1]} : vector<8x20xf32> to vector<8x16xf32>
    %cst_36 = arith.constant dense<0.000000e+00> : vector<8x16xf32>
    %47 = tpu.matmul %45, %46, %cst_36 {dimension_numbers = #tpu.dot_dimension_numbers<[1], [0], [0], [1], [0, 0, 1, 1], [], []>} : vector<8x8xbf16>, vector<8x16xf32>, vector<8x16xf32> -> vector<8x16xf32>
    %48 = arith.addf %43, %47 : vector<8x16xf32>
    %c0_37 = arith.constant 0 : index
    %c0_38 = arith.constant 0 : index
    %49 = vector.load %arg6[%c0_37, %c0_38] : memref<8x1xf32, #tpu.memory_space<vmem>>, vector<8x1xf32>
    %50 = vector.broadcast %49 : vector<8x1xf32> to vector<8x16xf32>
    %51 = arith.addf %48, %50 : vector<8x16xf32>
    %cst_39 = arith.constant 0.000000e+00 : f32
    %52 = vector.broadcast %cst_39 : f32 to vector<8x16xf32>
    %53 = arith.cmpf ogt, %51, %52 : vector<8x16xf32>
    %cst_40 = arith.constant 0.00999999977 : f32
    %54 = vector.broadcast %cst_40 : f32 to vector<8x16xf32>
    %55 = arith.mulf %54, %51 : vector<8x16xf32>
    %56 = arith.select %53, %51, %55 : vector<8x16xi1>, vector<8x16xf32>
    %57 = vector.extract_strided_slice %6 {offsets = [0, 4], sizes = [4, 16], strides = [1, 1]} : vector<4x20xbf16> to vector<4x16xbf16>
    %c0_41 = arith.constant 0 : index
    %c0_42 = arith.constant 0 : index
    %58 = vector.load %arg7[%c0_41, %c0_42] : memref<8x4xbf16, #tpu.memory_space<vmem>>, vector<8x4xbf16>
    %cst_43 = arith.constant dense<0.000000e+00> : vector<8x16xf32>
    %59 = tpu.matmul %58, %57, %cst_43 {dimension_numbers = #tpu.dot_dimension_numbers<[1], [0], [0], [1], [0, 0, 1, 1], [], []>} : vector<8x4xbf16>, vector<4x16xbf16>, vector<8x16xf32> -> vector<8x16xf32>
    %c0_44 = arith.constant 0 : index
    %c0_45 = arith.constant 0 : index
    %60 = vector.load %arg8[%c0_44, %c0_45] : memref<8x1xf32, #tpu.memory_space<vmem>>, vector<8x1xf32>
    %61 = vector.broadcast %60 : vector<8x1xf32> to vector<8x16xf32>
    %62 = arith.addf %59, %61 : vector<8x16xf32>
    %63 = arith.addf %56, %62 : vector<8x16xf32>
    %64 = arith.truncf %63 : vector<8x16xf32> to vector<8x16xbf16>
    %c0_46 = arith.constant 0 : index
    %c0_47 = arith.constant 0 : index
    %c0_48 = arith.constant 0 : index
    %65 = vector.load %arg9[%c0_46, %c0_47, %c0_48] : memref<1x8x16xbf16, #tpu.memory_space<vmem>>, vector<1x8x16xbf16>
    %66 = vector.shape_cast %65 : vector<1x8x16xbf16> to vector<8x16xbf16>
    %67 = vector.shape_cast %64 : vector<8x16xbf16> to vector<1x8x16xbf16>
    tpu.vector_store %arg9[%c0_46, %c0_47, %c0_48], %67 {strides = array<i32>} : memref<1x8x16xbf16, #tpu.memory_space<vmem>>, vector<1x8x16xbf16>,
    %68 = vector.extract_strided_slice %6 {offsets = [0, 16], sizes = [4, 4], strides = [1, 1]} : vector<4x20xbf16> to vector<4x4xbf16>
    %c0_49 = arith.constant 0 : index
    %c0_50 = arith.constant 0 : index
    %69 = vector.load %arg10[%c0_49, %c0_50] : memref<4x20xbf16, #tpu.memory_space<vmem>>, vector<4x4xbf16>
    tpu.vector_store %arg10[%c0_49, %c0_50], %68 {strides = array<i32>} : memref<4x20xbf16, #tpu.memory_space<vmem>>, vector<4x4xbf16>,
    %70 = vector.extract_strided_slice %32 {offsets = [0, 16], sizes = [8, 4], strides = [1, 1]} : vector<8x20xf32> to vector<8x4xf32>
    %c0_51 = arith.constant 0 : index
    %c0_52 = arith.constant 0 : index
    %71 = vector.load %arg11[%c0_51, %c0_52] : memref<8x20xf32, #tpu.memory_space<vmem>>, vector<8x4xf32>
    tpu.vector_store %arg11[%c0_51, %c0_52], %70 {strides = array<i32>} : memref<8x20xf32, #tpu.memory_space<vmem>>, vector<8x4xf32>,
    return
  }
  func.func @transform_0(%arg0: i32, %arg1: i32) -> (i32, i32, i32) {
    %c0_i32 = arith.constant 0 : i32
    %c0_i32_0 = arith.constant 0 : i32
    return %arg0, %c0_i32, %arg1 : i32, i32, i32
  }
  func.func @transform_1(%arg0: i32, %arg1: i32) -> (i32, i32, i32) {
    %c0_i32 = arith.constant 0 : i32
    %c0_i32_0 = arith.constant 0 : i32
    %c0_i32_1 = arith.constant 0 : i32
    %c0_i32_2 = arith.constant 0 : i32
    return %c0_i32, %c0_i32_0, %c0_i32_1 : i32, i32, i32
  }
  func.func @transform_2(%arg0: i32, %arg1: i32) -> (i32, i32) {
    %c0_i32 = arith.constant 0 : i32
    %c0_i32_0 = arith.constant 0 : i32
    %c0_i32_1 = arith.constant 0 : i32
    return %c0_i32, %c0_i32_0 : i32, i32
  }
  func.func @transform_3(%arg0: i32, %arg1: i32) -> (i32, i32, i32) {
    %c0_i32 = arith.constant 0 : i32
    %c0_i32_0 = arith.constant 0 : i32
    %c0_i32_1 = arith.constant 0 : i32
    %c0_i32_2 = arith.constant 0 : i32
    return %c0_i32, %c0_i32_0, %c0_i32_1 : i32, i32, i32
  }
  func.func @transform_4(%arg0: i32, %arg1: i32) -> (i32, i32) {
    %c0_i32 = arith.constant 0 : i32
    %c0_i32_0 = arith.constant 0 : i32
    %c0_i32_1 = arith.constant 0 : i32
    return %c0_i32, %c0_i32_0 : i32, i32
  }
  func.func @transform_5(%arg0: i32, %arg1: i32) -> (i32, i32) {
    %c0_i32 = arith.constant 0 : i32
    %c0_i32_0 = arith.constant 0 : i32
    %c0_i32_1 = arith.constant 0 : i32
    return %c0_i32, %c0_i32_0 : i32, i32
  }
  func.func @transform_6(%arg0: i32, %arg1: i32) -> (i32, i32) {
    %c0_i32 = arith.constant 0 : i32
    %c0_i32_0 = arith.constant 0 : i32
    %c0_i32_1 = arith.constant 0 : i32
    return %c0_i32, %c0_i32_0 : i32, i32
  }
  func.func @transform_7(%arg0: i32, %arg1: i32) -> (i32, i32, i32) {
    %c0_i32 = arith.constant 0 : i32
    %c0_i32_0 = arith.constant 0 : i32
    return %arg0, %c0_i32, %arg1 : i32, i32, i32
  }
}

</mosaic_0001>

<llo_original>
// kernel: tpu_custom_call.1
$region0: #{tpu_custom_call.1}
  #allocation0 [shape = 'u32[]', space=smem, size = 0x4, offset = 0x4, fixed_abs, tag = 'smem constant byte address 0x4 - core index']
  #allocation1 [shape = 'u32[144,128]{1,0:T(1,128)}', space=vmem, size = 0x12000, scoped, tag = 'internal scratch']
  #allocation2 [shape = 'bf16[4,20]{1,0:T(4,128)(2,1)}', space=vmem, size = 0x400, scoped, tag = 'scratch operand']
  #allocation3 [shape = 'f32[8,20]{1,0:T(8,128)}', space=vmem, size = 0x1000, scoped, tag = 'scratch operand']
  %s0 = inlined_call_operand.vmem [shape: bf16[2,4,16], index: 0, kind: input, shape index: {}]
  %s1 = inlined_call_operand.vmem [shape: bf16[3,8,4], index: 1, kind: input, shape index: {}]
  %s2 = inlined_call_operand.vmem [shape: f32[8,1], index: 2, kind: input, shape index: {}]
  %s3 = inlined_call_operand.vmem [shape: bf16[3,8,8], index: 3, kind: input, shape index: {}]
  %s4 = inlined_call_operand.vmem [shape: f32[8,1], index: 4, kind: input, shape index: {}]
  %s5 = inlined_call_operand.vmem [shape: bf16[8,4], index: 5, kind: input, shape index: {}]
  %s6 = inlined_call_operand.vmem [shape: f32[8,1], index: 6, kind: input, shape index: {}]
  %s7 = inlined_call_operand.hbm [shape: bf16[2,8,16], index: 7, kind: output, shape index: {}]
  %s8 = sld [smem:[#allocation0]]
  $region65: #{tpu_custom_call.1} parent=0
    _
  %s10 = ssub.s32 1, %s8
  %s11 = scalar_select 0, %s10, %s8
  $region1: #{tpu_custom_call.1} parent=0
    #allocation4 [shape = 'u8[4096]{0}', space=vmem, size = 0x1000, scoped, tag = 'output window, operand 0']
    #allocation5 [shape = 's32[2]{0}', space=sflag, size = 0x8, scoped, tag = 'scoped memory for tpu_custom_call.1']
    %12 = vsyncpa [#allocation5], 0
    %s13 = scalar_lea.sflag [#allocation5], 1
    %14 = vsyncpa %s13, 0
    loop: start=0, step=1, limit=4
    $region2: #{tpu_custom_call.1} parent=1 // loop_pre_header
      _
    $region3: #{tpu_custom_call.1} parent=1 // loop_header
      %s16 = sphi 0, %s20
      %p17 = scmp.ge.s32.totalorder %s16, 4
      %s23 = sphi 0, %s35
      %s24 = sphi 0, %s31
      %s25 = sphi 0, %s23
      %s26 = sphi 0, %s24
      %s27 = sphi 0, %s25
      %s28 = sphi 0, %s26
      %s40 = sphi 0, %s42
      %s43 = sphi 0, %s40
      %s44 = sphi 0, %s43
      %s60 = sphi 0, %s44
      %s64 = sphi 0, %s64
      %s66 = sphi 0, %s64
      %s67 = sphi 0, %s66
      %s81 = sphi 0, %s67
      %s85 = sphi 0, %s85
      %s87 = sphi 0, %s85
      %s88 = sphi 0, %s87
      %s102 = sphi 0, %s88
      %s106 = sphi 0, %s106
      %s108 = sphi 0, %s106
      %s109 = sphi 0, %s108
      %s123 = sphi 0, %s109
      %s127 = sphi 0, %s127
      %s129 = sphi 0, %s127
      %s130 = sphi 0, %s129
      %s144 = sphi 0, %s130
      %s148 = sphi 0, %s148
      %s150 = sphi 0, %s148
      %s151 = sphi 0, %s150
      %s165 = sphi 0, %s151
      %s169 = sphi 0, %s169
      %s171 = sphi 0, %s169
      %s172 = sphi 0, %s171
      %s186 = sphi 0, %s172
      %s194 = sphi 0, %s196
      %s197 = sphi 0, %s194
      %s198 = sphi 0, %s197
      %s214 = sphi 0, %s198
    $region4: #{tpu_custom_call.1} parent=1 // loop_header_branch
      %19 = sbr.rel (%p17) target = $region8
    $region5: #{tpu_custom_call.1} parent=1 // loop_body
      %s21 = ssub.s32 %s16, 1
      %s22 = ssub.s32 %s16, 2
      %s29 = sadd.s32 1, %s24
      %p30 = scmp.ge.s32.totalorder %s29, 1
      %s31 = scalar_select %p30, 0, %s29
      %s32 = sadd.s32 1, %s23
      %s33 = scalar_select %p30, %s32, %s23
      %p34 = scmp.ge.s32.totalorder %s33, 2
      %s35 = scalar_select %p34, 0, %s33
      %s36 = ssub.s32 %s23, %s35
      %s37 = ssub.s32 %s24, %s31
      %s38 = sor.u32 %s36, %s37
      %p39 = scmp.eq.s32.totalorder %s38, 0
      %s41 = sadd.s32 %s40, 1
      %s42 = scalar_select %p39, %s40, %s41
      %p45 = pneg %p39
      %p46 = scmp.eq.s32.totalorder %s16, 1
      %p47 = por %p45, %p46
      %p48 = scmp.ne.s32.totalorder %s40, %s43
      %p49 = scmp.eq.s32.totalorder %s16, 0
      %p50 = por %p48, %p49
      %p51 = scmp.ne.s32.totalorder %s40, %s43
      %p52 = scmp.eq.s32.totalorder %s21, 1
      %p53 = por %p51, %p52
      %p54 = scmp.ne.s32.totalorder %s43, %s44
      %p55 = scmp.eq.s32.totalorder %s21, 0
      %p56 = por %p54, %p55
      %p57 = scmp.ne.s32.totalorder %s43, %s44
      %p58 = scmp.eq.s32.totalorder %s22, 1
      %p59 = por %p57, %p58
      %p61 = scmp.ne.s32.totalorder %s44, %s60
      %p62 = scmp.eq.s32.totalorder %s22, 0
      %p63 = por %p61, %p62
      %s65 = sadd.s32 %s64, 1
      %p68 = scmp.eq.s32.totalorder %s16, 1
      %p69 = scmp.ne.s32.totalorder %s64, %s66
      %p70 = scmp.eq.s32.totalorder %s16, 0
      %p71 = por %p69, %p70
      %p72 = scmp.ne.s32.totalorder %s64, %s66
      %p73 = scmp.eq.s32.totalorder %s21, 1
      %p74 = por %p72, %p73
      %p75 = scmp.ne.s32.totalorder %s66, %s67
      %p76 = scmp.eq.s32.totalorder %s21, 0
      %p77 = por %p75, %p76
      %p78 = scmp.ne.s32.totalorder %s66, %s67
      %p79 = scmp.eq.s32.totalorder %s22, 1
      %p80 = por %p78, %p79
      %p82 = scmp.ne.s32.totalorder %s67, %s81
      %p83 = scmp.eq.s32.totalorder %s22, 0
      %p84 = por %p82, %p83
      %s86 = sadd.s32 %s85, 1
      %p89 = scmp.eq.s32.totalorder %s16, 1
      %p90 = scmp.ne.s32.totalorder %s85, %s87
      %p91 = scmp.eq.s32.totalorder %s16, 0
      %p92 = por %p90, %p91
      %p93 = scmp.ne.s32.totalorder %s85, %s87
      %p94 = scmp.eq.s32.totalorder %s21, 1
      %p95 = por %p93, %p94
      %p96 = scmp.ne.s32.totalorder %s87, %s88
      %p97 = scmp.eq.s32.totalorder %s21, 0
      %p98 = por %p96, %p97
      %p99 = scmp.ne.s32.totalorder %s87, %s88
      %p100 = scmp.eq.s32.totalorder %s22, 1
      %p101 = por %p99, %p100
      %p103 = scmp.ne.s32.totalorder %s88, %s102
      %p104 = scmp.eq.s32.totalorder %s22, 0
      %p105 = por %p103, %p104
      %s107 = sadd.s32 %s106, 1
      %p110 = scmp.eq.s32.totalorder %s16, 1
      %p111 = scmp.ne.s32.totalorder %s106, %s108
      %p112 = scmp.eq.s32.totalorder %s16, 0
      %p113 = por %p111, %p112
      %p114 = scmp.ne.s32.totalorder %s106, %s108
      %p115 = scmp.eq.s32.totalorder %s21, 1
      %p116 = por %p114, %p115
      %p117 = scmp.ne.s32.totalorder %s108, %s109
      %p118 = scmp.eq.s32.totalorder %s21, 0
      %p119 = por %p117, %p118
      %p120 = scmp.ne.s32.totalorder %s108, %s109
      %p121 = scmp.eq.s32.totalorder %s22, 1
      %p122 = por %p120, %p121
      %p124 = scmp.ne.s32.totalorder %s109, %s123
      %p125 = scmp.eq.s32.totalorder %s22, 0
      %p126 = por %p124, %p125
      %s128 = sadd.s32 %s127, 1
      %p131 = scmp.eq.s32.totalorder %s16, 1
      %p132 = scmp.ne.s32.totalorder %s127, %s129
      %p133 = scmp.eq.s32.totalorder %s16, 0
      %p134 = por %p132, %p133
      %p135 = scmp.ne.s32.totalorder %s127, %s129
      %p136 = scmp.eq.s32.totalorder %s21, 1
      %p137 = por %p135, %p136
      %p138 = scmp.ne.s32.totalorder %s129, %s130
      %p139 = scmp.eq.s32.totalorder %s21, 0
      %p140 = por %p138, %p139
      %p141 = scmp.ne.s32.totalorder %s129, %s130
      %p142 = scmp.eq.s32.totalorder %s22, 1
      %p143 = por %p141, %p142
      %p145 = scmp.ne.s32.totalorder %s130, %s144
      %p146 = scmp.eq.s32.totalorder %s22, 0
      %p147 = por %p145, %p146
      %s149 = sadd.s32 %s148, 1
      %p152 = scmp.eq.s32.totalorder %s16, 1
      %p153 = scmp.ne.s32.totalorder %s148, %s150
      %p154 = scmp.eq.s32.totalorder %s16, 0
      %p155 = por %p153, %p154
      %p156 = scmp.ne.s32.totalorder %s148, %s150
      %p157 = scmp.eq.s32.totalorder %s21, 1
      %p158 = por %p156, %p157
      %p159 = scmp.ne.s32.totalorder %s150, %s151
      %p160 = scmp.eq.s32.totalorder %s21, 0
      %p161 = por %p159, %p160
      %p162 = scmp.ne.s32.totalorder %s150, %s151
      %p163 = scmp.eq.s32.totalorder %s22, 1
      %p164 = por %p162, %p163
      %p166 = scmp.ne.s32.totalorder %s151, %s165
      %p167 = scmp.eq.s32.totalorder %s22, 0
      %p168 = por %p166, %p167
      %s170 = sadd.s32 %s169, 1
      %p173 = scmp.eq.s32.totalorder %s16, 1
      %p174 = scmp.ne.s32.totalorder %s169, %s171
      %p175 = scmp.eq.s32.totalorder %s16, 0
      %p176 = por %p174, %p175
      %p177 = scmp.ne.s32.totalorder %s169, %s171
      %p178 = scmp.eq.s32.totalorder %s21, 1
      %p179 = por %p177, %p178
      %p180 = scmp.ne.s32.totalorder %s171, %s172
      %p181 = scmp.eq.s32.totalorder %s21, 0
      %p182 = por %p180, %p181
      %p183 = scmp.ne.s32.totalorder %s171, %s172
      %p184 = scmp.eq.s32.totalorder %s22, 1
      %p185 = por %p183, %p184
      %p187 = scmp.ne.s32.totalorder %s172, %s186
      %p188 = scmp.eq.s32.totalorder %s22, 0
      %p189 = por %p187, %p188
      %s190 = ssub.s32 %s23, %s35
      %s191 = ssub.s32 %s24, %s31
      %s192 = sor.u32 %s190, %s191
      %p193 = scmp.eq.s32.totalorder %s192, 0
      %s195 = sadd.s32 %s194, 1
      %s196 = scalar_select %p193, %s194, %s195
      %p199 = pneg %p193
      %p200 = scmp.eq.s32.totalorder %s16, 1
      %p201 = por %p199, %p200
      %p202 = scmp.ne.s32.totalorder %s194, %s197
      %p203 = scmp.eq.s32.totalorder %s16, 0
      %p204 = por %p202, %p203
      %p205 = scmp.ne.s32.totalorder %s194, %s197
      %p206 = scmp.eq.s32.totalorder %s21, 1
      %p207 = por %p205, %p206
      %p208 = scmp.ne.s32.totalorder %s197, %s198
      %p209 = scmp.eq.s32.totalorder %s21, 0
      %p210 = por %p208, %p209
      %p211 = scmp.ne.s32.totalorder %s197, %s198
      %p212 = scmp.eq.s32.totalorder %s22, 1
      %p213 = por %p211, %p212
      %p215 = scmp.ne.s32.totalorder %s198, %s214
      %p216 = scmp.eq.s32.totalorder %s22, 0
      %p217 = por %p215, %p216
      %p218 = scmp.le.s32.totalorder 1, %s16
      %p219 = scmp.lt.s32.totalorder %s16, 3
      %p220 = pnand %p218, %p219
      %p221 = pneg %p220
      // Predicated region
      $region9: #{tpu_custom_call.1} parent=5 // pred_check
        _
      $region10: #{tpu_custom_call.1} parent=5 // pred_check_branch
        %223 = sbr.rel (%p220) target = $region12
      $region11: #{tpu_custom_call.1} parent=5 // pred_region
        %s224 = ssub.s32 %s16, 1
        // Predicated region
        $region13: #{tpu_custom_call.1} parent=11 // pred_check
          %p225 = pneg %p77
        $region14: #{tpu_custom_call.1} parent=11 // pred_check_branch
          %227 = sbr.rel (%p225) target = $region16
        $region15: #{tpu_custom_call.1} parent=11 // pred_region
          _
        $region16: #{tpu_custom_call.1} parent=11 // pred_fallthru
          _
        // Predicated region
        $region17: #{tpu_custom_call.1} parent=11 // pred_check
          %p228 = pneg %p98
        $region18: #{tpu_custom_call.1} parent=11 // pred_check_branch
          %230 = sbr.rel (%p228) target = $region20
        $region19: #{tpu_custom_call.1} parent=11 // pred_region
          _
        $region20: #{tpu_custom_call.1} parent=11 // pred_fallthru
          _
        // Predicated region
        $region21: #{tpu_custom_call.1} parent=11 // pred_check
          %p231 = pneg %p119
        $region22: #{tpu_custom_call.1} parent=11 // pred_check_branch
          %233 = sbr.rel (%p231) target = $region24
        $region23: #{tpu_custom_call.1} parent=11 // pred_region
          _
        $region24: #{tpu_custom_call.1} parent=11 // pred_fallthru
          _
        // Predicated region
        $region25: #{tpu_custom_call.1} parent=11 // pred_check
          %p234 = pneg %p140
        $region26: #{tpu_custom_call.1} parent=11 // pred_check_branch
          %236 = sbr.rel (%p234) target = $region28
        $region27: #{tpu_custom_call.1} parent=11 // pred_region
          _
        $region28: #{tpu_custom_call.1} parent=11 // pred_fallthru
          _
        // Predicated region
        $region29: #{tpu_custom_call.1} parent=11 // pred_check
          %p237 = pneg %p161
        $region30: #{tpu_custom_call.1} parent=11 // pred_check_branch
          %239 = sbr.rel (%p237) target = $region32
        $region31: #{tpu_custom_call.1} parent=11 // pred_region
          _
        $region32: #{tpu_custom_call.1} parent=11 // pred_fallthru
          _
        // Predicated region
        $region33: #{tpu_custom_call.1} parent=11 // pred_check
          %p240 = pneg %p182
        $region34: #{tpu_custom_call.1} parent=11 // pred_check_branch
          %242 = sbr.rel (%p240) target = $region36
        $region35: #{tpu_custom_call.1} parent=11 // pred_region
          _
        $region36: #{tpu_custom_call.1} parent=11 // pred_fallthru
          _
      $region12: #{tpu_custom_call.1} parent=5 // pred_fallthru
        _
      %p243 = scmp.lt.s32.totalorder %s16, 2
      // Predicated region
      $region37: #{tpu_custom_call.1} parent=5 // pred_check
        %p244 = pneg %p243
      $region38: #{tpu_custom_call.1} parent=5 // pred_check_branch
        %246 = sbr.rel (%p244) target = $region40
      $region39: #{tpu_custom_call.1} parent=5 // pred_region
        // Predicated region
        $region41: #{tpu_custom_call.1} parent=39 // pred_check
          %p247 = pneg %p50
        $region42: #{tpu_custom_call.1} parent=39 // pred_check_branch
          %249 = sbr.rel (%p247) target = $region44
        $region43: #{tpu_custom_call.1} parent=39 // pred_region
          %p250 = scmp.lt.s32.totalorder %s23, 1
          %s251 = scalar_select %p250, %s23, 1
          %p252 = scmp.lt.s32.totalorder %s24, 0
          %s253 = scalar_select %p252, %s24, 0
          %s254 = sadd.s32 %s253, %s251
          %s255 = smul.addr %s254, 2
          %s256 = scalar_lea.vmem %s0, %s255
        $region44: #{tpu_custom_call.1} parent=39 // pred_fallthru
          _
      $region40: #{tpu_custom_call.1} parent=5 // pred_fallthru
        _
      %p257 = scmp.le.s32.totalorder 1, %s16
      %p258 = scmp.lt.s32.totalorder %s16, 3
      %p259 = pnand %p257, %p258
      %p260 = pneg %p259
      // Predicated region
      $region45: #{tpu_custom_call.1} parent=5 // pred_check
        _
      $region46: #{tpu_custom_call.1} parent=5 // pred_check_branch
        %262 = sbr.rel (%p259) target = $region48
      $region47: #{tpu_custom_call.1} parent=5 // pred_region
        %s263 = ssub.s32 %s16, 1
        %p264 = scmp.lt.s32.totalorder %s25, 1
        %s265 = scalar_select %p264, %s25, 1
        %p266 = scmp.lt.s32.totalorder %s26, 0
        %s267 = scalar_select %p266, %s26, 0
        %s268 = sadd.s32 %s267, %s265
        %s269 = smul.addr %s268, 2
        %s270 = scalar_lea.vmem %s0, %s269
        %p271 = pneg %p56
        %p272 = pneg %p53
        %p273 = pneg %p77
        %p274 = pneg %p74
        %p275 = pneg %p98
        %p276 = pneg %p95
        %p277 = pneg %p119
        %p278 = pneg %p116
        %p279 = pneg %p140
        %p280 = pneg %p137
        %p281 = pneg %p161
        %p282 = pneg %p158
        %p283 = pneg %p182
        %p284 = pneg %p179
        %p285 = pneg %p210
        %p286 = pneg %p207
        %s287 = sand.u32 %s197, 1
        %s288 = scalar_lea.sflag [#allocation5], %s287
        %s289 = sand.u32 %s197, 1
        %s290 = smul.addr %s289, 4
        %s291 = scalar_lea.vmem [#allocation4], %s290
        %p292 = scmp.lt.s32.totalorder %s25, 1
        %s293 = scalar_select %p292, %s25, 1
        %p294 = scmp.lt.s32.totalorder %s26, 0
        %s295 = scalar_select %p294, %s26, 0
        %s296 = sadd.s32 %s295, %s293
        %s297 = smul.addr %s296, 2
        %s298 = scalar_lea.vmem %s0, %s297
        %p300 = scmp.eq.s32.totalorder %s26, 0
        // Predicated region
        $region49: #{tpu_custom_call.1} parent=47 // pred_check
          %p301 = pneg %p300
        $region50: #{tpu_custom_call.1} parent=47 // pred_check_branch
          %303 = sbr.rel (%p301) target = $region52
        $region51: #{tpu_custom_call.1} parent=47 // pred_region
          %vm304 = vcmask 25600
          %305 = vst.msk [vmem:[#allocation2] sm:$0x3] %vm304, 0
          %vm306 = vcmask 31744
          %307 = vst.msk [vmem:[#allocation3] sm:$0xff] %vm306, 0.0
        $region52: #{tpu_custom_call.1} parent=47 // pred_fallthru
          _
        %v308 = vld [vmem:[%s298] sm:$0x3]
        %310 = vrot.lane.b32.xlu0 %v308, 4
        %v311 = vpop.permute.xlu0 %310
        %vm313 = vcmask 156704
        %314 = vst.msk [vmem:[#allocation2] sm:$0x3] %vm313, %v311
        %v315 = vld [vmem:[#allocation2] sm:$0x3]
        %v316 = vld [vmem:[%s1] sm:$0xf]
        %s317 = scalar_lea.vmem %s1, 4
        %v318 = vld [vmem:[%s317] sm:$0xf]
        %v321 = vunpack.c.l.s4 1983009808
        %v322 = vunpack.c.0.s8 %v321
        %v323 = vlaneseq
        %v324 = vshrl.u32 %v323, 7
        %v325 = vsub.s32 %v322, %v324
        %v326 = vrot.slane %v315, %v325
        %327 = vrot.lane.b32.xlu0 %v326, 126
        %v328 = vpop.permute.xlu0 %327
        %vm329 = vcmask 31744
        %v331 = vsel %vm329, %v318, 0
        %vm333 = vcmask 1041408
        %v335 = vsel %vm333, %v328, 0
        %337 = vmatprep.subr.bf16.mxu0 0
        %338 = vmatpush1.bf16.msra.mxu0 %v335
        %339 = vmatprep.subr.bf16.mxu0 0
        %340 = vmatpush1.bf16.msra.mxu0 0
        %341 = vmatprep.subr.bf16.mxu0 0
        %342 = vmatpush1.bf16.msra.mxu0 0
        %343 = vmatprep.subr.bf16.mxu0 0
        %344 = vmatpush1.bf16.msra.mxu0 0
        %345 = vmatprep.subr.bf16.mxu0 0
        %346 = vmatpush1.bf16.msra.mxu0 0
        %347 = vmatprep.subr.bf16.mxu0 0
        %348 = vmatpush1.bf16.msra.mxu0 0
        %349 = vmatprep.subr.bf16.mxu0 0
        %350 = vmatpush1.bf16.msra.mxu0 0
        %351 = vmatprep.subr.bf16.mxu0 0
        %352 = vmatpush1.bf16.msra.mxu0 0
        %353 = vmatprep.subr.bf16.mxu0 0
        %354 = vmatpush1.bf16.msra.mxu0 0
        %355 = vmatprep.subr.bf16.mxu0 0
        %356 = vmatpush1.bf16.msra.mxu0 0
        %357 = vmatprep.subr.bf16.mxu0 0
        %358 = vmatpush1.bf16.msra.mxu0 0
        %359 = vmatprep.subr.bf16.mxu0 0
        %360 = vmatpush1.bf16.msra.mxu0 0
        %361 = vmatprep.subr.bf16.mxu0 0
        %362 = vmatpush1.bf16.msra.mxu0 0
        %363 = vmatprep.subr.bf16.mxu0 0
        %364 = vmatpush1.bf16.msra.mxu0 0
        %365 = vmatprep.subr.bf16.mxu0 0
        %366 = vmatpush1.bf16.msra.mxu0 0
        %367 = vmatprep.subr.bf16.mxu0 0
        %368 = vmatpush1.bf16.msra.mxu0 0
        %369 = vmatprep.mubr.bf16.mxu0 0
        %370 = vmatmul.mubr.bf16.gmra.mrb[0].mxu0 %v331
        %v371 = vpop.f32.mrb[0].mxu0
        %v372 = vadd.f32 0.0, %v371
        %v373 = vpop.f32.mrb[0].mxu0
        %v374 = vpop.f32.mrb[0].mxu0
        %v375 = vpop.f32.mrb[0].mxu0
        %376 = vdwg.mxu0
        %v378 = vsel %vm329, %v316, 0
        %v381 = vsel %vm333, %v315, 0
        %383 = vmatprep.subr.bf16.mxu0 0
        %384 = vmatpush1.bf16.msra.mxu0 %v381
        %385 = vmatprep.subr.bf16.mxu0 0
        %386 = vmatpush1.bf16.msra.mxu0 0
        %387 = vmatprep.subr.bf16.mxu0 0
        %388 = vmatpush1.bf16.msra.mxu0 0
        %389 = vmatprep.subr.bf16.mxu0 0
        %390 = vmatpush1.bf16.msra.mxu0 0
        %391 = vmatprep.subr.bf16.mxu0 0
        %392 = vmatpush1.bf16.msra.mxu0 0
        %393 = vmatprep.subr.bf16.mxu0 0
        %394 = vmatpush1.bf16.msra.mxu0 0
        %395 = vmatprep.subr.bf16.mxu0 0
        %396 = vmatpush1.bf16.msra.mxu0 0
        %397 = vmatprep.subr.bf16.mxu0 0
        %398 = vmatpush1.bf16.msra.mxu0 0
        %399 = vmatprep.subr.bf16.mxu0 0
        %400 = vmatpush1.bf16.msra.mxu0 0
        %401 = vmatprep.subr.bf16.mxu0 0
        %402 = vmatpush1.bf16.msra.mxu0 0
        %403 = vmatprep.subr.bf16.mxu0 0
        %404 = vmatpush1.bf16.msra.mxu0 0
        %405 = vmatprep.subr.bf16.mxu0 0
        %406 = vmatpush1.bf16.msra.mxu0 0
        %407 = vmatprep.subr.bf16.mxu0 0
        %408 = vmatpush1.bf16.msra.mxu0 0
        %409 = vmatprep.subr.bf16.mxu0 0
        %410 = vmatpush1.bf16.msra.mxu0 0
        %411 = vmatprep.subr.bf16.mxu0 0
        %412 = vmatpush1.bf16.msra.mxu0 0
        %413 = vmatprep.subr.bf16.mxu0 0
        %414 = vmatpush1.bf16.msra.mxu0 0
        %415 = vmatprep.mubr.bf16.mxu0 0
        %416 = vmatmul.mubr.bf16.gmra.mrb[0].mxu0 %v378
        %v417 = vpop.f32.mrb[0].mxu0
        %v418 = vadd.f32 %v372, %v417
        %v419 = vpop.f32.mrb[0].mxu0
        %v420 = vpop.f32.mrb[0].mxu0
        %v421 = vpop.f32.mrb[0].mxu0
        %422 = vdwg.mxu0
        %s423 = scalar_lea.vmem %s1, 8
        %v424 = vld [vmem:[%s423] sm:$0xf]
        %425 = vrot.lane.b32.xlu0 %v326, 124
        %v426 = vpop.permute.xlu0 %425
        %v428 = vsel %vm329, %v424, 0
        %v431 = vsel %vm333, %v426, 0
        %433 = vmatprep.subr.bf16.mxu0 0
        %434 = vmatpush1.bf16.msra.mxu0 %v431
        %435 = vmatprep.subr.bf16.mxu0 0
        %436 = vmatpush1.bf16.msra.mxu0 0
        %437 = vmatprep.subr.bf16.mxu0 0
        %438 = vmatpush1.bf16.msra.mxu0 0
        %439 = vmatprep.subr.bf16.mxu0 0
        %440 = vmatpush1.bf16.msra.mxu0 0
        %441 = vmatprep.subr.bf16.mxu0 0
        %442 = vmatpush1.bf16.msra.mxu0 0
        %443 = vmatprep.subr.bf16.mxu0 0
        %444 = vmatpush1.bf16.msra.mxu0 0
        %445 = vmatprep.subr.bf16.mxu0 0
        %446 = vmatpush1.bf16.msra.mxu0 0
        %447 = vmatprep.subr.bf16.mxu0 0
        %448 = vmatpush1.bf16.msra.mxu0 0
        %449 = vmatprep.subr.bf16.mxu0 0
        %450 = vmatpush1.bf16.msra.mxu0 0
        %451 = vmatprep.subr.bf16.mxu0 0
        %452 = vmatpush1.bf16.msra.mxu0 0
        %453 = vmatprep.subr.bf16.mxu0 0
        %454 = vmatpush1.bf16.msra.mxu0 0
        %455 = vmatprep.subr.bf16.mxu0 0
        %456 = vmatpush1.bf16.msra.mxu0 0
        %457 = vmatprep.subr.bf16.mxu0 0
        %458 = vmatpush1.bf16.msra.mxu0 0
        %459 = vmatprep.subr.bf16.mxu0 0
        %460 = vmatpush1.bf16.msra.mxu0 0
        %461 = vmatprep.subr.bf16.mxu0 0
        %462 = vmatpush1.bf16.msra.mxu0 0
        %463 = vmatprep.subr.bf16.mxu0 0
        %464 = vmatpush1.bf16.msra.mxu0 0
        %465 = vmatprep.mubr.bf16.mxu0 0
        %466 = vmatmul.mubr.bf16.gmra.mrb[0].mxu0 %v428
        %v467 = vpop.f32.mrb[0].mxu0
        %v468 = vadd.f32 0.0, %v467
        %v469 = vpop.f32.mrb[0].mxu0
        %v470 = vpop.f32.mrb[0].mxu0
        %v471 = vpop.f32.mrb[0].mxu0
        %472 = vdwg.mxu0
        %v473 = vadd.f32 %v418, %v468
        %v474 = vld [vmem:[%s2] sm:$0xff]
        %476 = vset.pattern.permute.xlu0 0
        %477 = vperm.xlu0 %476, %v474
        %v478 = vpop.permute.xlu0 %477
        %v480 = vadd.f32 %v473, %v478
        %vm481 = vcmp.gt.f32.partialorder %v480, 0.0
        %v482 = vmul.f32 %v480, 0.01
        %v483 = vsel %vm481, %v480, %v482
        %485 = vrot.lane.b32.xlu0 %v483, 4
        %v486 = vpop.permute.xlu0 %485
        %vm488 = vcmask 162848
        %489 = vst.msk [vmem:[#allocation3] sm:$0xff] %vm488, %v486
        %v490 = vld [vmem:[#allocation3] sm:$0xff]
        %v491 = vld [vmem:[%s3] sm:$0xf]
        %s492 = scalar_lea.vmem %s3, 4
        %v493 = vld [vmem:[%s492] sm:$0xf]
        %495 = vrot.lane.b32.xlu0 %v490, 126
        %v496 = vpop.permute.xlu0 %495
        %vm498 = vcmask 64512
        %v500 = vsel %vm498, %v493, 0
        %502 = vmatprep.subr.mxu0 0.0
        %503 = vmatpush1.msra.mxu0 %v496
        %504 = vmatprep.subr.mxu0 0.0
        %505 = vmatpush1.msra.mxu0 0.0
        %506 = vmatprep.subr.mxu0 0.0
        %507 = vmatpush1.msra.mxu0 0.0
        %508 = vmatprep.subr.mxu0 0.0
        %509 = vmatpush1.msra.mxu0 0.0
        %510 = vmatprep.subr.mxu0 0.0
        %511 = vmatpush1.msra.mxu0 0.0
        %512 = vmatprep.subr.mxu0 0.0
        %513 = vmatpush1.msra.mxu0 0.0
        %514 = vmatprep.subr.mxu0 0.0
        %515 = vmatpush1.msra.mxu0 0.0
        %516 = vmatprep.subr.mxu0 0.0
        %517 = vmatpush1.msra.mxu0 0.0
        %518 = vmatprep.subr.mxu0 0.0
        %519 = vmatpush1.msra.mxu0 0.0
        %520 = vmatprep.subr.mxu0 0.0
        %521 = vmatpush1.msra.mxu0 0.0
        %522 = vmatprep.subr.mxu0 0.0
        %523 = vmatpush1.msra.mxu0 0.0
        %524 = vmatprep.subr.mxu0 0.0
        %525 = vmatpush1.msra.mxu0 0.0
        %526 = vmatprep.subr.mxu0 0.0
        %527 = vmatpush1.msra.mxu0 0.0
        %528 = vmatprep.subr.mxu0 0.0
        %529 = vmatpush1.msra.mxu0 0.0
        %530 = vmatprep.subr.mxu0 0.0
        %531 = vmatpush1.msra.mxu0 0.0
        %532 = vmatprep.subr.mxu0 0.0
        %533 = vmatpush1.msra.mxu0 0.0
        %534 = vmatprep.subr.mxu0 0.0
        %535 = vmatpush1.msra.mxu0 0.0
        %536 = vmatprep.subr.mxu0 0.0
        %537 = vmatpush1.msra.mxu0 0.0
        %538 = vmatprep.subr.mxu0 0.0
        %539 = vmatpush1.msra.mxu0 0.0
        %540 = vmatprep.subr.mxu0 0.0
        %541 = vmatpush1.msra.mxu0 0.0
        %542 = vmatprep.subr.mxu0 0.0
        %543 = vmatpush1.msra.mxu0 0.0
        %544 = vmatprep.subr.mxu0 0.0
        %545 = vmatpush1.msra.mxu0 0.0
        %546 = vmatprep.subr.mxu0 0.0
        %547 = vmatpush1.msra.mxu0 0.0
        %548 = vmatprep.subr.mxu0 0.0
        %549 = vmatpush1.msra.mxu0 0.0
        %550 = vmatprep.subr.mxu0 0.0
        %551 = vmatpush1.msra.mxu0 0.0
        %552 = vmatprep.subr.mxu0 0.0
        %553 = vmatpush1.msra.mxu0 0.0
        %554 = vmatprep.subr.mxu0 0.0
        %555 = vmatpush1.msra.mxu0 0.0
        %556 = vmatprep.subr.mxu0 0.0
        %557 = vmatpush1.msra.mxu0 0.0
        %558 = vmatprep.subr.mxu0 0.0
        %559 = vmatpush1.msra.mxu0 0.0
        %560 = vmatprep.subr.mxu0 0.0
        %561 = vmatpush1.msra.mxu0 0.0
        %562 = vmatprep.subr.mxu0 0.0
        %563 = vmatpush1.msra.mxu0 0.0
        %564 = vmatprep.subr.mxu0 0.0
        %565 = vmatpush1.msra.mxu0 0.0
        %566 = vmatprep.mubr.bf16.mxu0 0
        %567 = vmatmul.mubr.bf16.gmra.mrb[0].mxu0 %v500
        %v568 = vpop.f32.mrb[0].mxu0
        %v569 = vadd.f32 0.0, %v568
        %v570 = vpop.f32.mrb[0].mxu0
        %v571 = vpop.f32.mrb[0].mxu0
        %v572 = vpop.f32.mrb[0].mxu0
        %573 = vdwg.mxu0
        %v575 = vsel %vm498, %v491, 0
        %577 = vmatprep.subr.mxu0 0.0
        %578 = vmatpush1.msra.mxu0 %v490
        %579 = vmatprep.subr.mxu0 0.0
        %580 = vmatpush1.msra.mxu0 0.0
        %581 = vmatprep.subr.mxu0 0.0
        %582 = vmatpush1.msra.mxu0 0.0
        %583 = vmatprep.subr.mxu0 0.0
        %584 = vmatpush1.msra.mxu0 0.0
        %585 = vmatprep.subr.mxu0 0.0
        %586 = vmatpush1.msra.mxu0 0.0
        %587 = vmatprep.subr.mxu0 0.0
        %588 = vmatpush1.msra.mxu0 0.0
        %589 = vmatprep.subr.mxu0 0.0
        %590 = vmatpush1.msra.mxu0 0.0
        %591 = vmatprep.subr.mxu0 0.0
        %592 = vmatpush1.msra.mxu0 0.0
        %593 = vmatprep.subr.mxu0 0.0
        %594 = vmatpush1.msra.mxu0 0.0
        %595 = vmatprep.subr.mxu0 0.0
        %596 = vmatpush1.msra.mxu0 0.0
        %597 = vmatprep.subr.mxu0 0.0
        %598 = vmatpush1.msra.mxu0 0.0
        %599 = vmatprep.subr.mxu0 0.0
        %600 = vmatpush1.msra.mxu0 0.0
        %601 = vmatprep.subr.mxu0 0.0
        %602 = vmatpush1.msra.mxu0 0.0
        %603 = vmatprep.subr.mxu0 0.0
        %604 = vmatpush1.msra.mxu0 0.0
        %605 = vmatprep.subr.mxu0 0.0
        %606 = vmatpush1.msra.mxu0 0.0
        %607 = vmatprep.subr.mxu0 0.0
        %608 = vmatpush1.msra.mxu0 0.0
        %609 = vmatprep.subr.mxu0 0.0
        %610 = vmatpush1.msra.mxu0 0.0
        %611 = vmatprep.subr.mxu0 0.0
        %612 = vmatpush1.msra.mxu0 0.0
        %613 = vmatprep.subr.mxu0 0.0
        %614 = vmatpush1.msra.mxu0 0.0
        %615 = vmatprep.subr.mxu0 0.0
        %616 = vmatpush1.msra.mxu0 0.0
        %617 = vmatprep.subr.mxu0 0.0
        %618 = vmatpush1.msra.mxu0 0.0
        %619 = vmatprep.subr.mxu0 0.0
        %620 = vmatpush1.msra.mxu0 0.0
        %621 = vmatprep.subr.mxu0 0.0
        %622 = vmatpush1.msra.mxu0 0.0
        %623 = vmatprep.subr.mxu0 0.0
        %624 = vmatpush1.msra.mxu0 0.0
        %625 = vmatprep.subr.mxu0 0.0
        %626 = vmatpush1.msra.mxu0 0.0
        %627 = vmatprep.subr.mxu0 0.0
        %628 = vmatpush1.msra.mxu0 0.0
        %629 = vmatprep.subr.mxu0 0.0
        %630 = vmatpush1.msra.mxu0 0.0
        %631 = vmatprep.subr.mxu0 0.0
        %632 = vmatpush1.msra.mxu0 0.0
        %633 = vmatprep.subr.mxu0 0.0
        %634 = vmatpush1.msra.mxu0 0.0
        %635 = vmatprep.subr.mxu0 0.0
        %636 = vmatpush1.msra.mxu0 0.0
        %637 = vmatprep.subr.mxu0 0.0
        %638 = vmatpush1.msra.mxu0 0.0
        %639 = vmatprep.subr.mxu0 0.0
        %640 = vmatpush1.msra.mxu0 0.0
        %641 = vmatprep.mubr.bf16.mxu0 0
        %642 = vmatmul.mubr.bf16.gmra.mrb[0].mxu0 %v575
        %v643 = vpop.f32.mrb[0].mxu0
        %v644 = vadd.f32 %v569, %v643
        %v645 = vpop.f32.mrb[0].mxu0
        %v646 = vpop.f32.mrb[0].mxu0
        %v647 = vpop.f32.mrb[0].mxu0
        %648 = vdwg.mxu0
        %s649 = scalar_lea.vmem %s3, 8
        %v650 = vld [vmem:[%s649] sm:$0xf]
        %651 = vrot.lane.b32.xlu0 %v490, 124
        %v652 = vpop.permute.xlu0 %651
        %v655 = vsel %vm498, %v650, 0
        %657 = vmatprep.subr.mxu0 0.0
        %658 = vmatpush1.msra.mxu0 %v652
        %659 = vmatprep.subr.mxu0 0.0
        %660 = vmatpush1.msra.mxu0 0.0
        %661 = vmatprep.subr.mxu0 0.0
        %662 = vmatpush1.msra.mxu0 0.0
        %663 = vmatprep.subr.mxu0 0.0
        %664 = vmatpush1.msra.mxu0 0.0
        %665 = vmatprep.subr.mxu0 0.0
        %666 = vmatpush1.msra.mxu0 0.0
        %667 = vmatprep.subr.mxu0 0.0
        %668 = vmatpush1.msra.mxu0 0.0
        %669 = vmatprep.subr.mxu0 0.0
        %670 = vmatpush1.msra.mxu0 0.0
        %671 = vmatprep.subr.mxu0 0.0
        %672 = vmatpush1.msra.mxu0 0.0
        %673 = vmatprep.subr.mxu0 0.0
        %674 = vmatpush1.msra.mxu0 0.0
        %675 = vmatprep.subr.mxu0 0.0
        %676 = vmatpush1.msra.mxu0 0.0
        %677 = vmatprep.subr.mxu0 0.0
        %678 = vmatpush1.msra.mxu0 0.0
        %679 = vmatprep.subr.mxu0 0.0
        %680 = vmatpush1.msra.mxu0 0.0
        %681 = vmatprep.subr.mxu0 0.0
        %682 = vmatpush1.msra.mxu0 0.0
        %683 = vmatprep.subr.mxu0 0.0
        %684 = vmatpush1.msra.mxu0 0.0
        %685 = vmatprep.subr.mxu0 0.0
        %686 = vmatpush1.msra.mxu0 0.0
        %687 = vmatprep.subr.mxu0 0.0
        %688 = vmatpush1.msra.mxu0 0.0
        %689 = vmatprep.subr.mxu0 0.0
        %690 = vmatpush1.msra.mxu0 0.0
        %691 = vmatprep.subr.mxu0 0.0
        %692 = vmatpush1.msra.mxu0 0.0
        %693 = vmatprep.subr.mxu0 0.0
        %694 = vmatpush1.msra.mxu0 0.0
        %695 = vmatprep.subr.mxu0 0.0
        %696 = vmatpush1.msra.mxu0 0.0
        %697 = vmatprep.subr.mxu0 0.0
        %698 = vmatpush1.msra.mxu0 0.0
        %699 = vmatprep.subr.mxu0 0.0
        %700 = vmatpush1.msra.mxu0 0.0
        %701 = vmatprep.subr.mxu0 0.0
        %702 = vmatpush1.msra.mxu0 0.0
        %703 = vmatprep.subr.mxu0 0.0
        %704 = vmatpush1.msra.mxu0 0.0
        %705 = vmatprep.subr.mxu0 0.0
        %706 = vmatpush1.msra.mxu0 0.0
        %707 = vmatprep.subr.mxu0 0.0
        %708 = vmatpush1.msra.mxu0 0.0
        %709 = vmatprep.subr.mxu0 0.0
        %710 = vmatpush1.msra.mxu0 0.0
        %711 = vmatprep.subr.mxu0 0.0
        %712 = vmatpush1.msra.mxu0 0.0
        %713 = vmatprep.subr.mxu0 0.0
        %714 = vmatpush1.msra.mxu0 0.0
        %715 = vmatprep.subr.mxu0 0.0
        %716 = vmatpush1.msra.mxu0 0.0
        %717 = vmatprep.subr.mxu0 0.0
        %718 = vmatpush1.msra.mxu0 0.0
        %719 = vmatprep.subr.mxu0 0.0
        %720 = vmatpush1.msra.mxu0 0.0
        %721 = vmatprep.mubr.bf16.mxu0 0
        %722 = vmatmul.mubr.bf16.gmra.mrb[0].mxu0 %v655
        %v723 = vpop.f32.mrb[0].mxu0
        %v724 = vadd.f32 0.0, %v723
        %v725 = vpop.f32.mrb[0].mxu0
        %v726 = vpop.f32.mrb[0].mxu0
        %v727 = vpop.f32.mrb[0].mxu0
        %728 = vdwg.mxu0
        %v729 = vadd.f32 %v644, %v724
        %v730 = vld [vmem:[%s4] sm:$0xff]
        %732 = vset.pattern.permute.xlu0 0
        %733 = vperm.xlu0 %732, %v730
        %v734 = vpop.permute.xlu0 %733
        %v736 = vadd.f32 %v729, %v734
        %vm737 = vcmp.gt.f32.partialorder %v736, 0.0
        %v738 = vmul.f32 %v736, 0.01
        %v739 = vsel %vm737, %v736, %v738
        %v740 = vld [vmem:[%s5] sm:$0xf]
        %v741 = vld [vmem:[%s6] sm:$0xff]
        %743 = vset.pattern.permute.xlu0 0
        %744 = vperm.xlu0 %743, %v741
        %v745 = vpop.permute.xlu0 %744
        %v748 = vsel %vm329, %v740, 0
        %750 = vmatprep.subr.bf16.mxu0 0
        %751 = vmatpush1.bf16.msra.mxu0 %v431
        %752 = vmatprep.subr.bf16.mxu0 0
        %753 = vmatpush1.bf16.msra.mxu0 0
        %754 = vmatprep.subr.bf16.mxu0 0
        %755 = vmatpush1.bf16.msra.mxu0 0
        %756 = vmatprep.subr.bf16.mxu0 0
        %757 = vmatpush1.bf16.msra.mxu0 0
        %758 = vmatprep.subr.bf16.mxu0 0
        %759 = vmatpush1.bf16.msra.mxu0 0
        %760 = vmatprep.subr.bf16.mxu0 0
        %761 = vmatpush1.bf16.msra.mxu0 0
        %762 = vmatprep.subr.bf16.mxu0 0
        %763 = vmatpush1.bf16.msra.mxu0 0
        %764 = vmatprep.subr.bf16.mxu0 0
        %765 = vmatpush1.bf16.msra.mxu0 0
        %766 = vmatprep.subr.bf16.mxu0 0
        %767 = vmatpush1.bf16.msra.mxu0 0
        %768 = vmatprep.subr.bf16.mxu0 0
        %769 = vmatpush1.bf16.msra.mxu0 0
        %770 = vmatprep.subr.bf16.mxu0 0
        %771 = vmatpush1.bf16.msra.mxu0 0
        %772 = vmatprep.subr.bf16.mxu0 0
        %773 = vmatpush1.bf16.msra.mxu0 0
        %774 = vmatprep.subr.bf16.mxu0 0
        %775 = vmatpush1.bf16.msra.mxu0 0
        %776 = vmatprep.subr.bf16.mxu0 0
        %777 = vmatpush1.bf16.msra.mxu0 0
        %778 = vmatprep.subr.bf16.mxu0 0
        %779 = vmatpush1.bf16.msra.mxu0 0
        %780 = vmatprep.subr.bf16.mxu0 0
        %781 = vmatpush1.bf16.msra.mxu0 0
        %782 = vmatprep.mubr.bf16.mxu0 0
        %783 = vmatmul.mubr.bf16.gmra.mrb[0].mxu0 %v748
        %v784 = vpop.f32.mrb[0].mxu0
        %v785 = vadd.f32 %v745, %v784
        %v786 = vpop.f32.mrb[0].mxu0
        %v787 = vpop.f32.mrb[0].mxu0
        %v788 = vpop.f32.mrb[0].mxu0
        %789 = vdwg.mxu0
        %v790 = vadd.f32 %v739, %v785
        %v791 = vpack.c.bf16 %v790, %v790
        %vm792 = vcmask 125952
        %793 = vst.msk [vmem:[%s291] sm:$0xf] %vm792, %v791
        %794 = vrot.lane.b32.xlu0 %v315, 112
        %v795 = vpop.permute.xlu0 %794
        %vm797 = vcmask 25600
        %798 = vst.msk [vmem:[#allocation2] sm:$0x3] %vm797, %v795
        %799 = vrot.lane.b32.xlu0 %v490, 112
        %v800 = vpop.permute.xlu0 %799
        %802 = vst.msk [vmem:[#allocation3] sm:$0xff] %vm329, %v800
        %s803 = sand.u32 %s197, 1
        %s804 = scalar_lea.sflag [#allocation5], %s803
        %s805 = sand.u32 %s197, 1
        %s806 = smul.addr %s805, 4
        %s807 = scalar_lea.vmem [#allocation4], %s806
        // Predicated region
        $region53: #{tpu_custom_call.1} parent=47 // pred_check
          %p808 = pneg %p207
        $region54: #{tpu_custom_call.1} parent=47 // pred_check_branch
          %810 = sbr.rel (%p808) target = $region56
        $region55: #{tpu_custom_call.1} parent=47 // pred_region
          %s812 = ssub.s32 64, 64
          %813 = vsyncadd %s804, %s812
          %s814 = sadd.s32 %s26, %s25
          %s815 = smul.addr %s814, 64
          %s816 = scalar_lea.hbm %s7, %s815
          %s818 = sshll.u32 %s807, 4
          %s819 = int_to_ptr.vmem [resolvable:$true] %s818
          %821 = dma.vmem_to_hbm [thread:$0]  %s819, 64, %s816, %s804
        $region56: #{tpu_custom_call.1} parent=47 // pred_fallthru
          _
      $region48: #{tpu_custom_call.1} parent=5 // pred_fallthru
        _
      %p822 = scmp.le.s32.totalorder 2, %s16
      // Predicated region
      $region57: #{tpu_custom_call.1} parent=5 // pred_check
        %p823 = pneg %p822
      $region58: #{tpu_custom_call.1} parent=5 // pred_check_branch
        %825 = sbr.rel (%p823) target = $region60
      $region59: #{tpu_custom_call.1} parent=5 // pred_region
        %s826 = ssub.s32 %s16, 2
        // Predicated region
        $region61: #{tpu_custom_call.1} parent=59 // pred_check
          %p827 = pneg %p213
        $region62: #{tpu_custom_call.1} parent=59 // pred_check_branch
          %829 = sbr.rel (%p827) target = $region64
        $region63: #{tpu_custom_call.1} parent=59 // pred_region
          %s830 = sand.u32 %s198, 1
          %s831 = scalar_lea.sflag [#allocation5], %s830
          %s832 = sand.u32 %s198, 1
          %s833 = smul.addr %s832, 4
          %s834 = scalar_lea.vmem [#allocation4], %s833
          %835 = dma.done %s831, 64
        $region64: #{tpu_custom_call.1} parent=59 // pred_fallthru
          _
      $region60: #{tpu_custom_call.1} parent=5 // pred_fallthru
        _
    $region6: #{tpu_custom_call.1} parent=1 // loop_footer
      %s20 = sadd.s32 1, %s16
    $region7: #{tpu_custom_call.1} parent=1 // loop_footer_branch
      %15 = sbr.rel target = $region3
    $region8: #{tpu_custom_call.1} parent=1 // loop_exit
      _
    %836 = vsyncpa [#allocation5], 1
    %s837 = scalar_lea.sflag [#allocation5], 1
    %838 = vsyncpa %s837, 1

</llo_original>
